<compile_context>
chip_gen: v6e
topology: v6e:2x2x1
jax: 0.10.0
libtpu: 0.0.40
codegen_flags: <defaults>
</compile_context>

<pallas_src>
import jax
import jax.numpy as jnp
from jax.experimental import pallas as pl
from jax.experimental.pallas import tpu as pltpu

NODES_PER_GRAPH = 129
USED_FEATS = 7
HIDDEN = 32
OUT = 2


def _mlp_kernel(x_ref, w1_ref, b1_ref, w2_ref, b2_ref, o_ref):
    # x_ref : (TB, K)    w1_ref : (K, 32)   b1_ref : (1, 32)
    # w2_ref: (32, 2)    b2_ref : (1, 2)    o_ref  : (TB, 2)
    h = jnp.dot(x_ref[...], w1_ref[...], preferred_element_type=jnp.float32)
    h = jnp.maximum(h + b1_ref[...], 0.0)          # ReLU (dropout p=0 -> identity)
    out = jnp.dot(h, w2_ref[...], preferred_element_type=jnp.float32)
    o_ref[...] = (out + b2_ref[...]).astype(o_ref.dtype)


def _choose_tile_rows(b_pad, k_feats):
    """Largest multiple of 8 whose double-buffered x tile fits ~16 MiB,
    capped at 2048 rows (amortizes ~0.35 us/grid-step) and at b_pad."""
    budget_bytes = 16 * 1024 * 1024
    tb = budget_bytes // (2 * k_feats * 4)
    tb = max(8, (tb // 8) * 8)
    return min(tb, 2048, b_pad)


def sbaseline_mlp(x_flat, w1_full, b1, b2, w2):
    """x_flat: (B, K) f32; w1_full: (K, 32); w2: (32, 2)."""
    B, K = x_flat.shape
    b1_2d = b1.reshape(1, HIDDEN)
    b2_2d = b2.reshape(1, OUT)

    # Pad B up to a multiple of 8 so the block sublane dim is always valid.
    B_pad = -(-B // 8) * 8
    if B_pad != B:
        x_flat = jnp.pad(x_flat, ((0, B_pad - B), (0, 0)))

    TB = _choose_tile_rows(B_pad, K)
    grid = (pl.cdiv(B_pad, TB),)

    out = pl.pallas_call(
        _mlp_kernel,
        out_shape=jax.ShapeDtypeStruct((B_pad, OUT), jnp.float32),
        grid=grid,
        in_specs=[
            pl.BlockSpec((TB, K), lambda i: (i, 0)),        # streamed x tiles
            pl.BlockSpec((K, HIDDEN), lambda i: (0, 0)),    # resident weights
            pl.BlockSpec((1, HIDDEN), lambda i: (0, 0)),
            pl.BlockSpec((HIDDEN, OUT), lambda i: (0, 0)),
            pl.BlockSpec((1, OUT), lambda i: (0, 0)),
        ],
        out_specs=pl.BlockSpec((TB, OUT), lambda i: (i, 0)),
        compiler_params=pltpu.CompilerParams(
            dimension_semantics=("parallel",),               # megacore on v7x
            vmem_limit_bytes=32 * 1024 * 1024,               # safe on v5e/v6e/v7x
        ),
    )(x_flat, w1_full, b1_2d, w2, b2_2d)

    return out[:B] if B_pad != B else out


def _fold_feature_slice_into_w1(w1, num_features):
    """Zero-pad w1 (129*7, 32) -> (129*F, 32) so the kernel can consume the
    raw (B, 129*F) reshape of x (a free view) instead of a sliced copy."""
    if num_features == USED_FEATS:
        return w1
    w1_3d = w1.reshape(NODES_PER_GRAPH, USED_FEATS, HIDDEN)
    w1_pad = jnp.pad(w1_3d, ((0, 0), (0, num_features - USED_FEATS), (0, 0)))
    return w1_pad.reshape(NODES_PER_GRAPH * num_features, HIDDEN)


def sbaseline_forward(x, edge_index, edge_attr, y, adj, params):
    """Mirrors SBaseline.forward. edge_index/edge_attr/adj are unused."""
    if x.ndim == 3:
        x = jnp.squeeze(x, 0)
        edge_index = jnp.squeeze(edge_index, 0)
        edge_attr = jnp.squeeze(edge_attr, 0)
        y = jnp.squeeze(y, 0)
    B = y.shape[0]
    F = x.shape[1]
    # Copy-less reshape (row-major contiguous): (B*129, F) -> (B, 129*F).
    x_flat = x.reshape(B, NODES_PER_GRAPH * F)
    w1_full = _fold_feature_slice_into_w1(params["w1"], F)
    out = sbaseline_mlp(x_flat, w1_full, params["b1"], params["b2"], params["w2"])
    reg = jnp.zeros((1,), dtype=jnp.float32)
    return out, reg


def init_params(key):
    """Deterministic init matching nn.Linear default (uniform +/- 1/sqrt(fan_in))."""
    k1, k2, k3, k4 = jax.random.split(key, 4)
    in_feats = USED_FEATS * NODES_PER_GRAPH
    bound1 = 1.0 / (in_feats ** 0.5)
    bound2 = 1.0 / (HIDDEN ** 0.5)
    # Weights stored pre-transposed for the kernel: (in, out).
    w1 = jax.random.uniform(k1, (in_feats, HIDDEN), jnp.float32, -bound1, bound1)
    b1 = jax.random.uniform(k2, (HIDDEN,), jnp.float32, -bound1, bound1)
    w2 = jax.random.uniform(k3, (HIDDEN, OUT), jnp.float32, -bound2, bound2)
    b2 = jax.random.uniform(k4, (OUT,), jnp.float32, -bound2, bound2)
    return {"w1": w1, "b1": b1, "w2": w2, "b2": b2}


if __name__ == "__main__":
    key = jax.random.PRNGKey(0)
    kx, ke, ky, kp = jax.random.split(key, 4)

    B = 2                      # number of graphs / labels
    num_features = 16          # >= 7
    N = B * NODES_PER_GRAPH    # 258 nodes
    E = 8                      # dummy edges (unused in forward compute)

    x = jax.random.normal(kx, (N, num_features), jnp.float32)
    edge_index = jax.random.randint(ke, (2, E), 0, N, jnp.int32)
    edge_attr = jax.random.normal(ke, (E, 4), jnp.float32)
    y = jax.random.randint(ky, (B,), 0, 2, jnp.int32)
    adj = jnp.zeros((N, N), jnp.float32)

    params = init_params(kp)

    out, reg = sbaseline_forward(x, edge_index, edge_attr, y, adj, params)
    jax.block_until_ready(out)
    jax.block_until_ready(reg)

    # Cross-check against plain-JAX reference of the original module math.
    x_flat_ref = x[:, :USED_FEATS].reshape(B, -1)
    ref = (jnp.maximum(x_flat_ref @ params["w1"] + params["b1"], 0.0)
           @ params["w2"] + params["b2"])
    assert out.shape == (B, OUT) and reg.shape == (1,)
    assert jnp.allclose(out, ref, atol=1e-4, rtol=1e-4)

    print("KERNEL_OK")
</pallas_src>

<mosaic_0001>
module attributes {stable_mosaic.version = 11 : i64} {
  func.func @_mlp_kernel(%arg0: i32, %arg1: memref<8x2064xf32, #tpu.memory_space<vmem>>, %arg2: memref<2064x32xf32, #tpu.memory_space<vmem>>, %arg3: memref<1x32xf32, #tpu.memory_space<vmem>>, %arg4: memref<32x2xf32, #tpu.memory_space<vmem>>, %arg5: memref<1x2xf32, #tpu.memory_space<vmem>>, %arg6: memref<8x2xf32, #tpu.memory_space<vmem>>) attributes {dimension_semantics = [#tpu.dimension_semantics<parallel>], iteration_bounds = array<i64: 1>, scalar_prefetch = 0 : i64, scratch_operands = 0 : i64, tpu.core_type = #tpu.core_type<tc>, window_params = [{transform_indices = @transform_0, window_bounds = array<i64: 8, 2064>}, {pipeline_mode = #tpu.pipeline_mode<synchronous>, transform_indices = @transform_1, window_bounds = array<i64: 2064, 32>}, {pipeline_mode = #tpu.pipeline_mode<synchronous>, transform_indices = @transform_2, window_bounds = array<i64: 1, 32>}, {pipeline_mode = #tpu.pipeline_mode<synchronous>, transform_indices = @transform_3, window_bounds = array<i64: 32, 2>}, {pipeline_mode = #tpu.pipeline_mode<synchronous>, transform_indices = @transform_4, window_bounds = array<i64: 1, 2>}, {transform_indices = @transform_5, window_bounds = array<i64: 8, 2>}]} {
    %c0 = arith.constant 0 : index
    %c0_0 = arith.constant 0 : index
    %0 = vector.load %arg1[%c0, %c0_0] : memref<8x2064xf32, #tpu.memory_space<vmem>>, vector<8x2064xf32>
    %c0_1 = arith.constant 0 : index
    %c0_2 = arith.constant 0 : index
    %1 = vector.load %arg2[%c0_1, %c0_2] : memref<2064x32xf32, #tpu.memory_space<vmem>>, vector<2064x32xf32>
    %cst = arith.constant dense<0.000000e+00> : vector<8x32xf32>
    %2 = tpu.matmul %0, %1, %cst {dimension_numbers = #tpu.dot_dimension_numbers<[1], [0], [0], [1], [0, 0, 1, 1], [], []>} : vector<8x2064xf32>, vector<2064x32xf32>, vector<8x32xf32> -> vector<8x32xf32>
    %c0_3 = arith.constant 0 : index
    %c0_4 = arith.constant 0 : index
    %3 = vector.load %arg3[%c0_3, %c0_4] : memref<1x32xf32, #tpu.memory_space<vmem>>, vector<1x32xf32>
    %4 = vector.broadcast %3 : vector<1x32xf32> to vector<8x32xf32>
    %5 = arith.addf %2, %4 : vector<8x32xf32>
    %cst_5 = arith.constant 0.000000e+00 : f32
    %6 = vector.broadcast %cst_5 : f32 to vector<8x32xf32>
    %7 = arith.maximumf %5, %6 : vector<8x32xf32>
    %c0_6 = arith.constant 0 : index
    %c0_7 = arith.constant 0 : index
    %8 = vector.load %arg4[%c0_6, %c0_7] : memref<32x2xf32, #tpu.memory_space<vmem>>, vector<32x2xf32>
    %cst_8 = arith.constant dense<0.000000e+00> : vector<8x2xf32>
    %9 = tpu.matmul %7, %8, %cst_8 {dimension_numbers = #tpu.dot_dimension_numbers<[1], [0], [0], [1], [0, 0, 1, 1], [], []>} : vector<8x32xf32>, vector<32x2xf32>, vector<8x2xf32> -> vector<8x2xf32>
    %c0_9 = arith.constant 0 : index
    %c0_10 = arith.constant 0 : index
    %10 = vector.load %arg5[%c0_9, %c0_10] : memref<1x2xf32, #tpu.memory_space<vmem>>, vector<1x2xf32>
    %11 = vector.broadcast %10 : vector<1x2xf32> to vector<8x2xf32>
    %12 = arith.addf %9, %11 : vector<8x2xf32>
    %c0_11 = arith.constant 0 : index
    %c0_12 = arith.constant 0 : index
    %13 = vector.load %arg6[%c0_11, %c0_12] : memref<8x2xf32, #tpu.memory_space<vmem>>, vector<8x2xf32>
    tpu.vector_store %arg6[%c0_11, %c0_12], %12 {strides = array<i32>} : memref<8x2xf32, #tpu.memory_space<vmem>>, vector<8x2xf32>,
    return
  }
  func.func @transform_0(%arg0: i32) -> (i32, i32) {
    %c0_i32 = arith.constant 0 : i32
    %c0_i32_0 = arith.constant 0 : i32
    return %arg0, %c0_i32 : i32, i32
  }
  func.func @transform_1(%arg0: i32) -> (i32, i32) {
    %c0_i32 = arith.constant 0 : i32
    %c0_i32_0 = arith.constant 0 : i32
    %c0_i32_1 = arith.constant 0 : i32
    return %c0_i32, %c0_i32_0 : i32, i32
  }
  func.func @transform_2(%arg0: i32) -> (i32, i32) {
    %c0_i32 = arith.constant 0 : i32
    %c0_i32_0 = arith.constant 0 : i32
    %c0_i32_1 = arith.constant 0 : i32
    return %c0_i32, %c0_i32_0 : i32, i32
  }
  func.func @transform_3(%arg0: i32) -> (i32, i32) {
    %c0_i32 = arith.constant 0 : i32
    %c0_i32_0 = arith.constant 0 : i32
    %c0_i32_1 = arith.constant 0 : i32
    return %c0_i32, %c0_i32_0 : i32, i32
  }
  func.func @transform_4(%arg0: i32) -> (i32, i32) {
    %c0_i32 = arith.constant 0 : i32
    %c0_i32_0 = arith.constant 0 : i32
    %c0_i32_1 = arith.constant 0 : i32
    return %c0_i32, %c0_i32_0 : i32, i32
  }
  func.func @transform_5(%arg0: i32) -> (i32, i32) {
    %c0_i32 = arith.constant 0 : i32
    %c0_i32_0 = arith.constant 0 : i32
    return %arg0, %c0_i32 : i32, i32
  }
}

</mosaic_0001>

<llo_original>
// kernel: tpu_custom_call.1
$region0: #{tpu_custom_call.1}
  #allocation0 [shape = 'u32[]', space=smem, size = 0x4, offset = 0x4, fixed_abs, tag = 'smem constant byte address 0x4 - core index']
  #allocation1 [shape = 'u32[144,128]{1,0:T(1,128)}', space=vmem, size = 0x12000, scoped, tag = 'internal scratch']
  %s0 = inlined_call_operand.vmem [shape: f32[8,2064], index: 0, kind: input, shape index: {}]
  %s1 = inlined_call_operand.vmem [shape: f32[2064,32], index: 1, kind: input, shape index: {}]
  %s2 = inlined_call_operand.vmem [shape: f32[1,32], index: 2, kind: input, shape index: {}]
  %s3 = inlined_call_operand.vmem [shape: f32[32,2], index: 3, kind: input, shape index: {}]
  %s4 = inlined_call_operand.vmem [shape: f32[1,2], index: 4, kind: input, shape index: {}]
  %s5 = inlined_call_operand.vmem [shape: f32[8,2], index: 5, kind: output, shape index: {}]
  %s6 = sld [smem:[#allocation0]]
  $region30: #{tpu_custom_call.1} parent=0
    _
  %s8 = ssub.s32 1, %s6
  %s9 = scalar_select 0, %s8, %s6
  // Predicated region
  $region2: #{tpu_custom_call.1} parent=0 // pred_check
    _
  $region3: #{tpu_custom_call.1} parent=0 // pred_check_branch
    %11 = sbr.rel (0) target = $region5
  $region4: #{tpu_custom_call.1} parent=0 // pred_region
    _
  $region5: #{tpu_custom_call.1} parent=0 // pred_fallthru
    _
  // Predicated region
  $region6: #{tpu_custom_call.1} parent=0 // pred_check
    _
  $region7: #{tpu_custom_call.1} parent=0 // pred_check_branch
    %13 = sbr.rel (0) target = $region9
  $region8: #{tpu_custom_call.1} parent=0 // pred_region
    _
  $region9: #{tpu_custom_call.1} parent=0 // pred_fallthru
    _
  // Predicated region
  $region10: #{tpu_custom_call.1} parent=0 // pred_check
    _
  $region11: #{tpu_custom_call.1} parent=0 // pred_check_branch
    %15 = sbr.rel (0) target = $region13
  $region12: #{tpu_custom_call.1} parent=0 // pred_region
    _
  $region13: #{tpu_custom_call.1} parent=0 // pred_fallthru
    _
  // Predicated region
  $region14: #{tpu_custom_call.1} parent=0 // pred_check
    _
  $region15: #{tpu_custom_call.1} parent=0 // pred_check_branch
    %17 = sbr.rel (0) target = $region17
  $region16: #{tpu_custom_call.1} parent=0 // pred_region
    _
  $region17: #{tpu_custom_call.1} parent=0 // pred_fallthru
    _
  // Predicated region
  $region18: #{tpu_custom_call.1} parent=0 // pred_check
    _
  $region19: #{tpu_custom_call.1} parent=0 // pred_check_branch
    %19 = sbr.rel (0) target = $region21
  $region20: #{tpu_custom_call.1} parent=0 // pred_region
    _
  $region21: #{tpu_custom_call.1} parent=0 // pred_fallthru
    _
  %v20 = vld [vmem:[%s0] sm:$0xff]
  %v21 = vld [vmem:[%s0 + $0x8] sm:$0xff]
  %v22 = vld [vmem:[%s0 + $0x10] sm:$0xff]
  %v23 = vld [vmem:[%s0 + $0x18] sm:$0xff]
  %v24 = vld [vmem:[%s0 + $0x20] sm:$0xff]
  %v25 = vld [vmem:[%s0 + $0x28] sm:$0xff]
  %v26 = vld [vmem:[%s0 + $0x30] sm:$0xff]
  %v27 = vld [vmem:[%s0 + $0x38] sm:$0xff]
  %v28 = vld [vmem:[%s0 + $0x40] sm:$0xff]
  %v29 = vld [vmem:[%s0 + $0x48] sm:$0xff]
  %v30 = vld [vmem:[%s0 + $0x50] sm:$0xff]
  %v31 = vld [vmem:[%s0 + $0x58] sm:$0xff]
  %v32 = vld [vmem:[%s0 + $0x60] sm:$0xff]
  %v33 = vld [vmem:[%s0 + $0x68] sm:$0xff]
  %v34 = vld [vmem:[%s0 + $0x70] sm:$0xff]
  %v35 = vld [vmem:[%s0 + $0x78] sm:$0xff]
  %v36 = vld [vmem:[%s0 + $0x80] sm:$0xff]
  %v37 = vld [vmem:[%s1] sm:$0xff]
  %v38 = vld [vmem:[%s1 + $0x8] sm:$0xff]
  %v39 = vld [vmem:[%s1 + $0x10] sm:$0xff]
  %v40 = vld [vmem:[%s1 + $0x18] sm:$0xff]
  %v41 = vld [vmem:[%s1 + $0x20] sm:$0xff]
  %v42 = vld [vmem:[%s1 + $0x28] sm:$0xff]
  %v43 = vld [vmem:[%s1 + $0x30] sm:$0xff]
  %v44 = vld [vmem:[%s1 + $0x38] sm:$0xff]
  %v45 = vld [vmem:[%s1 + $0x40] sm:$0xff]
  %v46 = vld [vmem:[%s1 + $0x48] sm:$0xff]
  %v47 = vld [vmem:[%s1 + $0x50] sm:$0xff]
  %v48 = vld [vmem:[%s1 + $0x58] sm:$0xff]
  %v49 = vld [vmem:[%s1 + $0x60] sm:$0xff]
  %v50 = vld [vmem:[%s1 + $0x68] sm:$0xff]
  %v51 = vld [vmem:[%s1 + $0x70] sm:$0xff]
  %v52 = vld [vmem:[%s1 + $0x78] sm:$0xff]
  %v53 = vld [vmem:[%s1 + $0x80] sm:$0xff]
  %v54 = vld [vmem:[%s1 + $0x88] sm:$0xff]
  %v55 = vld [vmem:[%s1 + $0x90] sm:$0xff]
  %v56 = vld [vmem:[%s1 + $0x98] sm:$0xff]
  %v57 = vld [vmem:[%s1 + $0xa0] sm:$0xff]
  %v58 = vld [vmem:[%s1 + $0xa8] sm:$0xff]
  %v59 = vld [vmem:[%s1 + $0xb0] sm:$0xff]
  %v60 = vld [vmem:[%s1 + $0xb8] sm:$0xff]
  %v61 = vld [vmem:[%s1 + $0xc0] sm:$0xff]
  %v62 = vld [vmem:[%s1 + $0xc8] sm:$0xff]
  %v63 = vld [vmem:[%s1 + $0xd0] sm:$0xff]
  %v64 = vld [vmem:[%s1 + $0xd8] sm:$0xff]
  %v65 = vld [vmem:[%s1 + $0xe0] sm:$0xff]
  %v66 = vld [vmem:[%s1 + $0xe8] sm:$0xff]
  %v67 = vld [vmem:[%s1 + $0xf0] sm:$0xff]
  %v68 = vld [vmem:[%s1 + $0xf8] sm:$0xff]
  %v69 = vld [vmem:[%s1 + $0x100] sm:$0xff]
  %v70 = vld [vmem:[%s1 + $0x108] sm:$0xff]
  %v71 = vld [vmem:[%s1 + $0x110] sm:$0xff]
  %v72 = vld [vmem:[%s1 + $0x118] sm:$0xff]
  %v73 = vld [vmem:[%s1 + $0x120] sm:$0xff]
  %v74 = vld [vmem:[%s1 + $0x128] sm:$0xff]
  %v75 = vld [vmem:[%s1 + $0x130] sm:$0xff]
  %v76 = vld [vmem:[%s1 + $0x138] sm:$0xff]
  %v77 = vld [vmem:[%s1 + $0x140] sm:$0xff]
  %v78 = vld [vmem:[%s1 + $0x148] sm:$0xff]
  %v79 = vld [vmem:[%s1 + $0x150] sm:$0xff]
  %v80 = vld [vmem:[%s1 + $0x158] sm:$0xff]
  %v81 = vld [vmem:[%s1 + $0x160] sm:$0xff]
  %v82 = vld [vmem:[%s1 + $0x168] sm:$0xff]
  %v83 = vld [vmem:[%s1 + $0x170] sm:$0xff]
  %v84 = vld [vmem:[%s1 + $0x178] sm:$0xff]
  %v85 = vld [vmem:[%s1 + $0x180] sm:$0xff]
  %v86 = vld [vmem:[%s1 + $0x188] sm:$0xff]
  %v87 = vld [vmem:[%s1 + $0x190] sm:$0xff]
  %v88 = vld [vmem:[%s1 + $0x198] sm:$0xff]
  %v89 = vld [vmem:[%s1 + $0x1a0] sm:$0xff]
  %v90 = vld [vmem:[%s1 + $0x1a8] sm:$0xff]
  %v91 = vld [vmem:[%s1 + $0x1b0] sm:$0xff]
  %v92 = vld [vmem:[%s1 + $0x1b8] sm:$0xff]
  %v93 = vld [vmem:[%s1 + $0x1c0] sm:$0xff]
  %v94 = vld [vmem:[%s1 + $0x1c8] sm:$0xff]
  %v95 = vld [vmem:[%s1 + $0x1d0] sm:$0xff]
  %v96 = vld [vmem:[%s1 + $0x1d8] sm:$0xff]
  %v97 = vld [vmem:[%s1 + $0x1e0] sm:$0xff]
  %v98 = vld [vmem:[%s1 + $0x1e8] sm:$0xff]
  %v99 = vld [vmem:[%s1 + $0x1f0] sm:$0xff]
  %v100 = vld [vmem:[%s1 + $0x1f8] sm:$0xff]
  %v101 = vld [vmem:[%s1 + $0x200] sm:$0xff]
  %v102 = vld [vmem:[%s1 + $0x208] sm:$0xff]
  %v103 = vld [vmem:[%s1 + $0x210] sm:$0xff]
  %v104 = vld [vmem:[%s1 + $0x218] sm:$0xff]
  %v105 = vld [vmem:[%s1 + $0x220] sm:$0xff]
  %v106 = vld [vmem:[%s1 + $0x228] sm:$0xff]
  %v107 = vld [vmem:[%s1 + $0x230] sm:$0xff]
  %v108 = vld [vmem:[%s1 + $0x238] sm:$0xff]
  %v109 = vld [vmem:[%s1 + $0x240] sm:$0xff]
  %v110 = vld [vmem:[%s1 + $0x248] sm:$0xff]
  %v111 = vld [vmem:[%s1 + $0x250] sm:$0xff]
  %v112 = vld [vmem:[%s1 + $0x258] sm:$0xff]
  %v113 = vld [vmem:[%s1 + $0x260] sm:$0xff]
  %v114 = vld [vmem:[%s1 + $0x268] sm:$0xff]
  %v115 = vld [vmem:[%s1 + $0x270] sm:$0xff]
  %v116 = vld [vmem:[%s1 + $0x278] sm:$0xff]
  %v117 = vld [vmem:[%s1 + $0x280] sm:$0xff]
  %v118 = vld [vmem:[%s1 + $0x288] sm:$0xff]
  %v119 = vld [vmem:[%s1 + $0x290] sm:$0xff]
  %v120 = vld [vmem:[%s1 + $0x298] sm:$0xff]
  %v121 = vld [vmem:[%s1 + $0x2a0] sm:$0xff]
  %v122 = vld [vmem:[%s1 + $0x2a8] sm:$0xff]
  %v123 = vld [vmem:[%s1 + $0x2b0] sm:$0xff]
  %v124 = vld [vmem:[%s1 + $0x2b8] sm:$0xff]
  %v125 = vld [vmem:[%s1 + $0x2c0] sm:$0xff]
  %v126 = vld [vmem:[%s1 + $0x2c8] sm:$0xff]
  %v127 = vld [vmem:[%s1 + $0x2d0] sm:$0xff]
  %v128 = vld [vmem:[%s1 + $0x2d8] sm:$0xff]
  %v129 = vld [vmem:[%s1 + $0x2e0] sm:$0xff]
  %v130 = vld [vmem:[%s1 + $0x2e8] sm:$0xff]
  %v131 = vld [vmem:[%s1 + $0x2f0] sm:$0xff]
  %v132 = vld [vmem:[%s1 + $0x2f8] sm:$0xff]
  %v133 = vld [vmem:[%s1 + $0x300] sm:$0xff]
  %v134 = vld [vmem:[%s1 + $0x308] sm:$0xff]
  %v135 = vld [vmem:[%s1 + $0x310] sm:$0xff]
  %v136 = vld [vmem:[%s1 + $0x318] sm:$0xff]
  %v137 = vld [vmem:[%s1 + $0x320] sm:$0xff]
  %v138 = vld [vmem:[%s1 + $0x328] sm:$0xff]
  %v139 = vld [vmem:[%s1 + $0x330] sm:$0xff]
  %v140 = vld [vmem:[%s1 + $0x338] sm:$0xff]
  %v141 = vld [vmem:[%s1 + $0x340] sm:$0xff]
  %v142 = vld [vmem:[%s1 + $0x348] sm:$0xff]
  %v143 = vld [vmem:[%s1 + $0x350] sm:$0xff]
  %v144 = vld [vmem:[%s1 + $0x358] sm:$0xff]
  %v145 = vld [vmem:[%s1 + $0x360] sm:$0xff]
  %v146 = vld [vmem:[%s1 + $0x368] sm:$0xff]
  %v147 = vld [vmem:[%s1 + $0x370] sm:$0xff]
  %v148 = vld [vmem:[%s1 + $0x378] sm:$0xff]
  %v149 = vld [vmem:[%s1 + $0x380] sm:$0xff]
  %v150 = vld [vmem:[%s1 + $0x388] sm:$0xff]
  %v151 = vld [vmem:[%s1 + $0x390] sm:$0xff]
  %v152 = vld [vmem:[%s1 + $0x398] sm:$0xff]
  %v153 = vld [vmem:[%s1 + $0x3a0] sm:$0xff]
  %v154 = vld [vmem:[%s1 + $0x3a8] sm:$0xff]
  %v155 = vld [vmem:[%s1 + $0x3b0] sm:$0xff]
  %v156 = vld [vmem:[%s1 + $0x3b8] sm:$0xff]
  %v157 = vld [vmem:[%s1 + $0x3c0] sm:$0xff]
  %v158 = vld [vmem:[%s1 + $0x3c8] sm:$0xff]
  %v159 = vld [vmem:[%s1 + $0x3d0] sm:$0xff]
  %v160 = vld [vmem:[%s1 + $0x3d8] sm:$0xff]
  %v161 = vld [vmem:[%s1 + $0x3e0] sm:$0xff]
  %v162 = vld [vmem:[%s1 + $0x3e8] sm:$0xff]
  %v163 = vld [vmem:[%s1 + $0x3f0] sm:$0xff]
  %v164 = vld [vmem:[%s1 + $0x3f8] sm:$0xff]
  %v165 = vld [vmem:[%s1 + $0x400] sm:$0xff]
  %v166 = vld [vmem:[%s1 + $0x408] sm:$0xff]
  %v167 = vld [vmem:[%s1 + $0x410] sm:$0xff]
  %v168 = vld [vmem:[%s1 + $0x418] sm:$0xff]
  %v169 = vld [vmem:[%s1 + $0x420] sm:$0xff]
  %v170 = vld [vmem:[%s1 + $0x428] sm:$0xff]
  %v171 = vld [vmem:[%s1 + $0x430] sm:$0xff]
  %v172 = vld [vmem:[%s1 + $0x438] sm:$0xff]
  %v173 = vld [vmem:[%s1 + $0x440] sm:$0xff]
  %v174 = vld [vmem:[%s1 + $0x448] sm:$0xff]
  %v175 = vld [vmem:[%s1 + $0x450] sm:$0xff]
  %v176 = vld [vmem:[%s1 + $0x458] sm:$0xff]
  %v177 = vld [vmem:[%s1 + $0x460] sm:$0xff]
  %v178 = vld [vmem:[%s1 + $0x468] sm:$0xff]
  %v179 = vld [vmem:[%s1 + $0x470] sm:$0xff]
  %v180 = vld [vmem:[%s1 + $0x478] sm:$0xff]
  %v181 = vld [vmem:[%s1 + $0x480] sm:$0xff]
  %v182 = vld [vmem:[%s1 + $0x488] sm:$0xff]
  %v183 = vld [vmem:[%s1 + $0x490] sm:$0xff]
  %v184 = vld [vmem:[%s1 + $0x498] sm:$0xff]
  %v185 = vld [vmem:[%s1 + $0x4a0] sm:$0xff]
  %v186 = vld [vmem:[%s1 + $0x4a8] sm:$0xff]
  %v187 = vld [vmem:[%s1 + $0x4b0] sm:$0xff]
  %v188 = vld [vmem:[%s1 + $0x4b8] sm:$0xff]
  %v189 = vld [vmem:[%s1 + $0x4c0] sm:$0xff]
  %v190 = vld [vmem:[%s1 + $0x4c8] sm:$0xff]
  %v191 = vld [vmem:[%s1 + $0x4d0] sm:$0xff]
  %v192 = vld [vmem:[%s1 + $0x4d8] sm:$0xff]
  %v193 = vld [vmem:[%s1 + $0x4e0] sm:$0xff]
  %v194 = vld [vmem:[%s1 + $0x4e8] sm:$0xff]
  %v195 = vld [vmem:[%s1 + $0x4f0] sm:$0xff]
  %v196 = vld [vmem:[%s1 + $0x4f8] sm:$0xff]
  %v197 = vld [vmem:[%s1 + $0x500] sm:$0xff]
  %v198 = vld [vmem:[%s1 + $0x508] sm:$0xff]
  %v199 = vld [vmem:[%s1 + $0x510] sm:$0xff]
  %v200 = vld [vmem:[%s1 + $0x518] sm:$0xff]
  %v201 = vld [vmem:[%s1 + $0x520] sm:$0xff]
  %v202 = vld [vmem:[%s1 + $0x528] sm:$0xff]
  %v203 = vld [vmem:[%s1 + $0x530] sm:$0xff]
  %v204 = vld [vmem:[%s1 + $0x538] sm:$0xff]
  %v205 = vld [vmem:[%s1 + $0x540] sm:$0xff]
  %v206 = vld [vmem:[%s1 + $0x548] sm:$0xff]
  %v207 = vld [vmem:[%s1 + $0x550] sm:$0xff]
  %v208 = vld [vmem:[%s1 + $0x558] sm:$0xff]
  %v209 = vld [vmem:[%s1 + $0x560] sm:$0xff]
  %v210 = vld [vmem:[%s1 + $0x568] sm:$0xff]
  %v211 = vld [vmem:[%s1 + $0x570] sm:$0xff]
  %v212 = vld [vmem:[%s1 + $0x578] sm:$0xff]
  %v213 = vld [vmem:[%s1 + $0x580] sm:$0xff]
  %v214 = vld [vmem:[%s1 + $0x588] sm:$0xff]
  %v215 = vld [vmem:[%s1 + $0x590] sm:$0xff]
  %v216 = vld [vmem:[%s1 + $0x598] sm:$0xff]
  %v217 = vld [vmem:[%s1 + $0x5a0] sm:$0xff]
  %v218 = vld [vmem:[%s1 + $0x5a8] sm:$0xff]
  %v219 = vld [vmem:[%s1 + $0x5b0] sm:$0xff]
  %v220 = vld [vmem:[%s1 + $0x5b8] sm:$0xff]
  %v221 = vld [vmem:[%s1 + $0x5c0] sm:$0xff]
  %v222 = vld [vmem:[%s1 + $0x5c8] sm:$0xff]
  %v223 = vld [vmem:[%s1 + $0x5d0] sm:$0xff]
  %v224 = vld [vmem:[%s1 + $0x5d8] sm:$0xff]
  %v225 = vld [vmem:[%s1 + $0x5e0] sm:$0xff]
  %v226 = vld [vmem:[%s1 + $0x5e8] sm:$0xff]
  %v227 = vld [vmem:[%s1 + $0x5f0] sm:$0xff]
  %v228 = vld [vmem:[%s1 + $0x5f8] sm:$0xff]
  %v229 = vld [vmem:[%s1 + $0x600] sm:$0xff]
  %v230 = vld [vmem:[%s1 + $0x608] sm:$0xff]
  %v231 = vld [vmem:[%s1 + $0x610] sm:$0xff]
  %v232 = vld [vmem:[%s1 + $0x618] sm:$0xff]
  %v233 = vld [vmem:[%s1 + $0x620] sm:$0xff]
  %v234 = vld [vmem:[%s1 + $0x628] sm:$0xff]
  %v235 = vld [vmem:[%s1 + $0x630] sm:$0xff]
  %v236 = vld [vmem:[%s1 + $0x638] sm:$0xff]
  %v237 = vld [vmem:[%s1 + $0x640] sm:$0xff]
  %v238 = vld [vmem:[%s1 + $0x648] sm:$0xff]
  %v239 = vld [vmem:[%s1 + $0x650] sm:$0xff]
  %v240 = vld [vmem:[%s1 + $0x658] sm:$0xff]
  %v241 = vld [vmem:[%s1 + $0x660] sm:$0xff]
  %v242 = vld [vmem:[%s1 + $0x668] sm:$0xff]
  %v243 = vld [vmem:[%s1 + $0x670] sm:$0xff]
  %v244 = vld [vmem:[%s1 + $0x678] sm:$0xff]
  %v245 = vld [vmem:[%s1 + $0x680] sm:$0xff]
  %v246 = vld [vmem:[%s1 + $0x688] sm:$0xff]
  %v247 = vld [vmem:[%s1 + $0x690] sm:$0xff]
  %v248 = vld [vmem:[%s1 + $0x698] sm:$0xff]
  %v249 = vld [vmem:[%s1 + $0x6a0] sm:$0xff]
  %v250 = vld [vmem:[%s1 + $0x6a8] sm:$0xff]
  %v251 = vld [vmem:[%s1 + $0x6b0] sm:$0xff]
  %v252 = vld [vmem:[%s1 + $0x6b8] sm:$0xff]
  %v253 = vld [vmem:[%s1 + $0x6c0] sm:$0xff]
  %v254 = vld [vmem:[%s1 + $0x6c8] sm:$0xff]
  %v255 = vld [vmem:[%s1 + $0x6d0] sm:$0xff]
  %v256 = vld [vmem:[%s1 + $0x6d8] sm:$0xff]
  %v257 = vld [vmem:[%s1 + $0x6e0] sm:$0xff]
  %v258 = vld [vmem:[%s1 + $0x6e8] sm:$0xff]
  %v259 = vld [vmem:[%s1 + $0x6f0] sm:$0xff]
  %v260 = vld [vmem:[%s1 + $0x6f8] sm:$0xff]
  %v261 = vld [vmem:[%s1 + $0x700] sm:$0xff]
  %v262 = vld [vmem:[%s1 + $0x708] sm:$0xff]
  %v263 = vld [vmem:[%s1 + $0x710] sm:$0xff]
  %v264 = vld [vmem:[%s1 + $0x718] sm:$0xff]
  %v265 = vld [vmem:[%s1 + $0x720] sm:$0xff]
  %v266 = vld [vmem:[%s1 + $0x728] sm:$0xff]
  %v267 = vld [vmem:[%s1 + $0x730] sm:$0xff]
  %v268 = vld [vmem:[%s1 + $0x738] sm:$0xff]
  %v269 = vld [vmem:[%s1 + $0x740] sm:$0xff]
  %v270 = vld [vmem:[%s1 + $0x748] sm:$0xff]
  %v271 = vld [vmem:[%s1 + $0x750] sm:$0xff]
  %v272 = vld [vmem:[%s1 + $0x758] sm:$0xff]
  %v273 = vld [vmem:[%s1 + $0x760] sm:$0xff]
  %v274 = vld [vmem:[%s1 + $0x768] sm:$0xff]
  %v275 = vld [vmem:[%s1 + $0x770] sm:$0xff]
  %v276 = vld [vmem:[%s1 + $0x778] sm:$0xff]
  %v277 = vld [vmem:[%s1 + $0x780] sm:$0xff]
  %v278 = vld [vmem:[%s1 + $0x788] sm:$0xff]
  %v279 = vld [vmem:[%s1 + $0x790] sm:$0xff]
  %v280 = vld [vmem:[%s1 + $0x798] sm:$0xff]
  %v281 = vld [vmem:[%s1 + $0x7a0] sm:$0xff]
  %v282 = vld [vmem:[%s1 + $0x7a8] sm:$0xff]
  %v283 = vld [vmem:[%s1 + $0x7b0] sm:$0xff]
  %v284 = vld [vmem:[%s1 + $0x7b8] sm:$0xff]
  %v285 = vld [vmem:[%s1 + $0x7c0] sm:$0xff]
  %v286 = vld [vmem:[%s1 + $0x7c8] sm:$0xff]
  %v287 = vld [vmem:[%s1 + $0x7d0] sm:$0xff]
  %v288 = vld [vmem:[%s1 + $0x7d8] sm:$0xff]
  %v289 = vld [vmem:[%s1 + $0x7e0] sm:$0xff]
  %v290 = vld [vmem:[%s1 + $0x7e8] sm:$0xff]
  %v291 = vld [vmem:[%s1 + $0x7f0] sm:$0xff]
  %v292 = vld [vmem:[%s1 + $0x7f8] sm:$0xff]
  %v293 = vld [vmem:[%s1 + $0x800] sm:$0xff]
  %v294 = vld [vmem:[%s1 + $0x808] sm:$0xff]
  %v295 = vld [vmem:[%s2] sm:$0x1]
  %v297 = vlaneseq
  %v298 = vshrl.u32 %v297, 7
  %v299 = vsub.s32 0, %v298
  %v300 = vrot.slane %v295, %v299
  %vm302 = vcmask 130048
  %v304 = vsel %vm302, %v36, 0
  %306 = vmatprep.subr.mxu0 0.0
  %307 = vmatpush1.msra.mxu0 %v52
  %308 = vmatprep.subr.mxu0 0.0
  %309 = vmatpush1.msra.mxu0 %v51
  %310 = vmatprep.subr.mxu0 0.0
  %311 = vmatpush1.msra.mxu0 %v50
  %312 = vmatprep.subr.mxu0 0.0
  %313 = vmatpush1.msra.mxu0 %v49
  %314 = vmatprep.subr.mxu0 0.0
  %315 = vmatpush1.msra.mxu0 %v48
  %316 = vmatprep.subr.mxu0 0.0
  %317 = vmatpush1.msra.mxu0 %v47
  %318 = vmatprep.subr.mxu0 0.0
  %319 = vmatpush1.msra.mxu0 %v46
  %320 = vmatprep.subr.mxu0 0.0
  %321 = vmatpush1.msra.mxu0 %v45
  %322 = vmatprep.subr.mxu0 0.0
  %323 = vmatpush1.msra.mxu0 %v44
  %324 = vmatprep.subr.mxu0 0.0
  %325 = vmatpush1.msra.mxu0 %v43
  %326 = vmatprep.subr.mxu0 0.0
  %327 = vmatpush1.msra.mxu0 %v42
  %328 = vmatprep.subr.mxu0 0.0
  %329 = vmatpush1.msra.mxu0 %v41
  %330 = vmatprep.subr.mxu0 0.0
  %331 = vmatpush1.msra.mxu0 %v40
  %332 = vmatprep.subr.mxu0 0.0
  %333 = vmatpush1.msra.mxu0 %v39
  %334 = vmatprep.subr.mxu0 0.0
  %335 = vmatpush1.msra.mxu0 %v38
  %336 = vmatprep.subr.mxu0 0.0
  %337 = vmatpush1.msra.mxu0 %v37
  %338 = vmatprep.subr.mxu0 0.0
  %339 = vmatpush2.msra.mxu0 %v68
  %340 = vmatprep.subr.mxu0 0.0
  %341 = vmatpush2.msra.mxu0 %v67
  %342 = vmatprep.subr.mxu0 0.0
  %343 = vmatpush2.msra.mxu0 %v66
  %344 = vmatprep.subr.mxu0 0.0
  %345 = vmatpush2.msra.mxu0 %v65
  %346 = vmatprep.subr.mxu0 0.0
  %347 = vmatpush2.msra.mxu0 %v64
  %348 = vmatprep.subr.mxu0 0.0
  %349 = vmatpush2.msra.mxu0 %v63
  %350 = vmatprep.subr.mxu0 0.0
  %351 = vmatpush2.msra.mxu0 %v62
  %352 = vmatprep.subr.mxu0 0.0
  %353 = vmatpush2.msra.mxu0 %v61
  %354 = vmatprep.subr.mxu0 0.0
  %355 = vmatpush2.msra.mxu0 %v60
  %356 = vmatprep.subr.mxu0 0.0
  %357 = vmatpush2.msra.mxu0 %v59
  %358 = vmatprep.subr.mxu0 0.0
  %359 = vmatpush2.msra.mxu0 %v58
  %360 = vmatprep.subr.mxu0 0.0
  %361 = vmatpush2.msra.mxu0 %v57
  %362 = vmatprep.subr.mxu0 0.0
  %363 = vmatpush2.msra.mxu0 %v56
  %364 = vmatprep.subr.mxu0 0.0
  %365 = vmatpush2.msra.mxu0 %v55
  %366 = vmatprep.subr.mxu0 0.0
  %367 = vmatpush2.msra.mxu0 %v54
  %368 = vmatprep.subr.mxu0 0.0
  %369 = vmatpush2.msra.mxu0 %v53
  %370 = vmatprep.mubr.f32.mxu0 %v21
  %371 = vmatmul.mubr.f32.gmra.mxu0 %v20
  %v372 = vpop.f32.mrf.mxu0
  %v373 = vadd.f32 %v300, %v372
  %v374 = vpop.f32.mrf.mxu0
  %375 = vdwg.mxu0
  %376 = vmatprep.subr.mxu0 0.0
  %377 = vmatpush1.msra.mxu0 %v84
  %378 = vmatprep.subr.mxu0 0.0
  %379 = vmatpush1.msra.mxu0 %v83
  %380 = vmatprep.subr.mxu0 0.0
  %381 = vmatpush1.msra.mxu0 %v82
  %382 = vmatprep.subr.mxu0 0.0
  %383 = vmatpush1.msra.mxu0 %v81
  %384 = vmatprep.subr.mxu0 0.0
  %385 = vmatpush1.msra.mxu0 %v80
  %386 = vmatprep.subr.mxu0 0.0
  %387 = vmatpush1.msra.mxu0 %v79
  %388 = vmatprep.subr.mxu0 0.0
  %389 = vmatpush1.msra.mxu0 %v78
  %390 = vmatprep.subr.mxu0 0.0
  %391 = vmatpush1.msra.mxu0 %v77
  %392 = vmatprep.subr.mxu0 0.0
  %393 = vmatpush1.msra.mxu0 %v76
  %394 = vmatprep.subr.mxu0 0.0
  %395 = vmatpush1.msra.mxu0 %v75
  %396 = vmatprep.subr.mxu0 0.0
  %397 = vmatpush1.msra.mxu0 %v74
  %398 = vmatprep.subr.mxu0 0.0
  %399 = vmatpush1.msra.mxu0 %v73
  %400 = vmatprep.subr.mxu0 0.0
  %401 = vmatpush1.msra.mxu0 %v72
  %402 = vmatprep.subr.mxu0 0.0
  %403 = vmatpush1.msra.mxu0 %v71
  %404 = vmatprep.subr.mxu0 0.0
  %405 = vmatpush1.msra.mxu0 %v70
  %406 = vmatprep.subr.mxu0 0.0
  %407 = vmatpush1.msra.mxu0 %v69
  %408 = vmatprep.subr.mxu0 0.0
  %409 = vmatpush2.msra.mxu0 %v100
  %410 = vmatprep.subr.mxu0 0.0
  %411 = vmatpush2.msra.mxu0 %v99
  %412 = vmatprep.subr.mxu0 0.0
  %413 = vmatpush2.msra.mxu0 %v98
  %414 = vmatprep.subr.mxu0 0.0
  %415 = vmatpush2.msra.mxu0 %v97
  %416 = vmatprep.subr.mxu0 0.0
  %417 = vmatpush2.msra.mxu0 %v96
  %418 = vmatprep.subr.mxu0 0.0
  %419 = vmatpush2.msra.mxu0 %v95
  %420 = vmatprep.subr.mxu0 0.0
  %421 = vmatpush2.msra.mxu0 %v94
  %422 = vmatprep.subr.mxu0 0.0
  %423 = vmatpush2.msra.mxu0 %v93
  %424 = vmatprep.subr.mxu0 0.0
  %425 = vmatpush2.msra.mxu0 %v92
  %426 = vmatprep.subr.mxu0 0.0
  %427 = vmatpush2.msra.mxu0 %v91
  %428 = vmatprep.subr.mxu0 0.0
  %429 = vmatpush2.msra.mxu0 %v90
  %430 = vmatprep.subr.mxu0 0.0
  %431 = vmatpush2.msra.mxu0 %v89
  %432 = vmatprep.subr.mxu0 0.0
  %433 = vmatpush2.msra.mxu0 %v88
  %434 = vmatprep.subr.mxu0 0.0
  %435 = vmatpush2.msra.mxu0 %v87
  %436 = vmatprep.subr.mxu0 0.0
  %437 = vmatpush2.msra.mxu0 %v86
  %438 = vmatprep.subr.mxu0 0.0
  %439 = vmatpush2.msra.mxu0 %v85
  %440 = vmatprep.mubr.f32.mxu0 %v23
  %441 = vmatmul.mubr.f32.gmra.mxu0 %v22
  %v442 = vpop.f32.mrf.mxu0
  %v443 = vadd.f32 %v373, %v442
  %v444 = vpop.f32.mrf.mxu0
  %445 = vdwg.mxu0
  %446 = vmatprep.subr.mxu0 0.0
  %447 = vmatpush1.msra.mxu0 %v116
  %448 = vmatprep.subr.mxu0 0.0
  %449 = vmatpush1.msra.mxu0 %v115
  %450 = vmatprep.subr.mxu0 0.0
  %451 = vmatpush1.msra.mxu0 %v114
  %452 = vmatprep.subr.mxu0 0.0
  %453 = vmatpush1.msra.mxu0 %v113
  %454 = vmatprep.subr.mxu0 0.0
  %455 = vmatpush1.msra.mxu0 %v112
  %456 = vmatprep.subr.mxu0 0.0
  %457 = vmatpush1.msra.mxu0 %v111
  %458 = vmatprep.subr.mxu0 0.0
  %459 = vmatpush1.msra.mxu0 %v110
  %460 = vmatprep.subr.mxu0 0.0
  %461 = vmatpush1.msra.mxu0 %v109
  %462 = vmatprep.subr.mxu0 0.0
  %463 = vmatpush1.msra.mxu0 %v108
  %464 = vmatprep.subr.mxu0 0.0
  %465 = vmatpush1.msra.mxu0 %v107
  %466 = vmatprep.subr.mxu0 0.0
  %467 = vmatpush1.msra.mxu0 %v106
  %468 = vmatprep.subr.mxu0 0.0
  %469 = vmatpush1.msra.mxu0 %v105
  %470 = vmatprep.subr.mxu0 0.0
  %471 = vmatpush1.msra.mxu0 %v104
  %472 = vmatprep.subr.mxu0 0.0
  %473 = vmatpush1.msra.mxu0 %v103
  %474 = vmatprep.subr.mxu0 0.0
  %475 = vmatpush1.msra.mxu0 %v102
  %476 = vmatprep.subr.mxu0 0.0
  %477 = vmatpush1.msra.mxu0 %v101
  %478 = vmatprep.subr.mxu0 0.0
  %479 = vmatpush2.msra.mxu0 %v132
  %480 = vmatprep.subr.mxu0 0.0
  %481 = vmatpush2.msra.mxu0 %v131
  %482 = vmatprep.subr.mxu0 0.0
  %483 = vmatpush2.msra.mxu0 %v130
  %484 = vmatprep.subr.mxu0 0.0
  %485 = vmatpush2.msra.mxu0 %v129
  %486 = vmatprep.subr.mxu0 0.0
  %487 = vmatpush2.msra.mxu0 %v128
  %488 = vmatprep.subr.mxu0 0.0
  %489 = vmatpush2.msra.mxu0 %v127
  %490 = vmatprep.subr.mxu0 0.0
  %491 = vmatpush2.msra.mxu0 %v126
  %492 = vmatprep.subr.mxu0 0.0
  %493 = vmatpush2.msra.mxu0 %v125
  %494 = vmatprep.subr.mxu0 0.0
  %495 = vmatpush2.msra.mxu0 %v124
  %496 = vmatprep.subr.mxu0 0.0
  %497 = vmatpush2.msra.mxu0 %v123
  %498 = vmatprep.subr.mxu0 0.0
  %499 = vmatpush2.msra.mxu0 %v122
  %500 = vmatprep.subr.mxu0 0.0
  %501 = vmatpush2.msra.mxu0 %v121
  %502 = vmatprep.subr.mxu0 0.0
  %503 = vmatpush2.msra.mxu0 %v120
  %504 = vmatprep.subr.mxu0 0.0
  %505 = vmatpush2.msra.mxu0 %v119
  %506 = vmatprep.subr.mxu0 0.0
  %507 = vmatpush2.msra.mxu0 %v118
  %508 = vmatprep.subr.mxu0 0.0
  %509 = vmatpush2.msra.mxu0 %v117
  %510 = vmatprep.mubr.f32.mxu0 %v25
  %511 = vmatmul.mubr.f32.gmra.mxu0 %v24
  %v512 = vpop.f32.mrf.mxu0
  %v513 = vadd.f32 %v443, %v512
  %v514 = vpop.f32.mrf.mxu0
  %515 = vdwg.mxu0
  %516 = vmatprep.subr.mxu0 0.0
  %517 = vmatpush1.msra.mxu0 %v148
  %518 = vmatprep.subr.mxu0 0.0
  %519 = vmatpush1.msra.mxu0 %v147
  %520 = vmatprep.subr.mxu0 0.0
  %521 = vmatpush1.msra.mxu0 %v146
  %522 = vmatprep.subr.mxu0 0.0
  %523 = vmatpush1.msra.mxu0 %v145
  %524 = vmatprep.subr.mxu0 0.0
  %525 = vmatpush1.msra.mxu0 %v144
  %526 = vmatprep.subr.mxu0 0.0
  %527 = vmatpush1.msra.mxu0 %v143
  %528 = vmatprep.subr.mxu0 0.0
  %529 = vmatpush1.msra.mxu0 %v142
  %530 = vmatprep.subr.mxu0 0.0
  %531 = vmatpush1.msra.mxu0 %v141
  %532 = vmatprep.subr.mxu0 0.0
  %533 = vmatpush1.msra.mxu0 %v140
  %534 = vmatprep.subr.mxu0 0.0
  %535 = vmatpush1.msra.mxu0 %v139
  %536 = vmatprep.subr.mxu0 0.0
  %537 = vmatpush1.msra.mxu0 %v138
  %538 = vmatprep.subr.mxu0 0.0
  %539 = vmatpush1.msra.mxu0 %v137
  %540 = vmatprep.subr.mxu0 0.0
  %541 = vmatpush1.msra.mxu0 %v136
  %542 = vmatprep.subr.mxu0 0.0
  %543 = vmatpush1.msra.mxu0 %v135
  %544 = vmatprep.subr.mxu0 0.0
  %545 = vmatpush1.msra.mxu0 %v134
  %546 = vmatprep.subr.mxu0 0.0
  %547 = vmatpush1.msra.mxu0 %v133
  %548 = vmatprep.subr.mxu0 0.0
  %549 = vmatpush2.msra.mxu0 %v164
  %550 = vmatprep.subr.mxu0 0.0
  %551 = vmatpush2.msra.mxu0 %v163
  %552 = vmatprep.subr.mxu0 0.0
  %553 = vmatpush2.msra.mxu0 %v162
  %554 = vmatprep.subr.mxu0 0.0
  %555 = vmatpush2.msra.mxu0 %v161
  %556 = vmatprep.subr.mxu0 0.0
  %557 = vmatpush2.msra.mxu0 %v160
  %558 = vmatprep.subr.mxu0 0.0
  %559 = vmatpush2.msra.mxu0 %v159
  %560 = vmatprep.subr.mxu0 0.0
  %561 = vmatpush2.msra.mxu0 %v158
  %562 = vmatprep.subr.mxu0 0.0
  %563 = vmatpush2.msra.mxu0 %v157
  %564 = vmatprep.subr.mxu0 0.0
  %565 = vmatpush2.msra.mxu0 %v156
  %566 = vmatprep.subr.mxu0 0.0
  %567 = vmatpush2.msra.mxu0 %v155
  %568 = vmatprep.subr.mxu0 0.0
  %569 = vmatpush2.msra.mxu0 %v154
  %570 = vmatprep.subr.mxu0 0.0
  %571 = vmatpush2.msra.mxu0 %v153
  %572 = vmatprep.subr.mxu0 0.0
  %573 = vmatpush2.msra.mxu0 %v152
  %574 = vmatprep.subr.mxu0 0.0
  %575 = vmatpush2.msra.mxu0 %v151
  %576 = vmatprep.subr.mxu0 0.0
  %577 = vmatpush2.msra.mxu0 %v150
  %578 = vmatprep.subr.mxu0 0.0
  %579 = vmatpush2.msra.mxu0 %v149
  %580 = vmatprep.mubr.f32.mxu0 %v27
  %581 = vmatmul.mubr.f32.gmra.mxu0 %v26
  %v582 = vpop.f32.mrf.mxu0
  %v583 = vadd.f32 %v513, %v582
  %v584 = vpop.f32.mrf.mxu0
  %585 = vdwg.mxu0
  %586 = vmatprep.subr.mxu0 0.0
  %587 = vmatpush1.msra.mxu0 %v180
  %588 = vmatprep.subr.mxu0 0.0
  %589 = vmatpush1.msra.mxu0 %v179
  %590 = vmatprep.subr.mxu0 0.0
  %591 = vmatpush1.msra.mxu0 %v178
  %592 = vmatprep.subr.mxu0 0.0
  %593 = vmatpush1.msra.mxu0 %v177
  %594 = vmatprep.subr.mxu0 0.0
  %595 = vmatpush1.msra.mxu0 %v176
  %596 = vmatprep.subr.mxu0 0.0
  %597 = vmatpush1.msra.mxu0 %v175
  %598 = vmatprep.subr.mxu0 0.0
  %599 = vmatpush1.msra.mxu0 %v174
  %600 = vmatprep.subr.mxu0 0.0
  %601 = vmatpush1.msra.mxu0 %v173
  %602 = vmatprep.subr.mxu0 0.0
  %603 = vmatpush1.msra.mxu0 %v172
  %604 = vmatprep.subr.mxu0 0.0
  %605 = vmatpush1.msra.mxu0 %v171
  %606 = vmatprep.subr.mxu0 0.0
  %607 = vmatpush1.msra.mxu0 %v170
  %608 = vmatprep.subr.mxu0 0.0
  %609 = vmatpush1.msra.mxu0 %v169
  %610 = vmatprep.subr.mxu0 0.0
  %611 = vmatpush1.msra.mxu0 %v168
  %612 = vmatprep.subr.mxu0 0.0
  %613 = vmatpush1.msra.mxu0 %v167
  %614 = vmatprep.subr.mxu0 0.0
  %615 = vmatpush1.msra.mxu0 %v166
  %616 = vmatprep.subr.mxu0 0.0
  %617 = vmatpush1.msra.mxu0 %v165
  %618 = vmatprep.subr.mxu0 0.0
  %619 = vmatpush2.msra.mxu0 %v196
  %620 = vmatprep.subr.mxu0 0.0
  %621 = vmatpush2.msra.mxu0 %v195
  %622 = vmatprep.subr.mxu0 0.0
  %623 = vmatpush2.msra.mxu0 %v194
  %624 = vmatprep.subr.mxu0 0.0
  %625 = vmatpush2.msra.mxu0 %v193
  %626 = vmatprep.subr.mxu0 0.0
  %627 = vmatpush2.msra.mxu0 %v192
  %628 = vmatprep.subr.mxu0 0.0
  %629 = vmatpush2.msra.mxu0 %v191
  %630 = vmatprep.subr.mxu0 0.0
  %631 = vmatpush2.msra.mxu0 %v190
  %632 = vmatprep.subr.mxu0 0.0
  %633 = vmatpush2.msra.mxu0 %v189
  %634 = vmatprep.subr.mxu0 0.0
  %635 = vmatpush2.msra.mxu0 %v188
  %636 = vmatprep.subr.mxu0 0.0
  %637 = vmatpush2.msra.mxu0 %v187
  %638 = vmatprep.subr.mxu0 0.0
  %639 = vmatpush2.msra.mxu0 %v186
  %640 = vmatprep.subr.mxu0 0.0
  %641 = vmatpush2.msra.mxu0 %v185
  %642 = vmatprep.subr.mxu0 0.0
  %643 = vmatpush2.msra.mxu0 %v184
  %644 = vmatprep.subr.mxu0 0.0
  %645 = vmatpush2.msra.mxu0 %v183
  %646 = vmatprep.subr.mxu0 0.0
  %647 = vmatpush2.msra.mxu0 %v182
  %648 = vmatprep.subr.mxu0 0.0
  %649 = vmatpush2.msra.mxu0 %v181
  %650 = vmatprep.mubr.f32.mxu0 %v29
  %651 = vmatmul.mubr.f32.gmra.mxu0 %v28
  %v652 = vpop.f32.mrf.mxu0
  %v653 = vadd.f32 %v583, %v652
  %v654 = vpop.f32.mrf.mxu0
  %655 = vdwg.mxu0
  %656 = vmatprep.subr.mxu0 0.0
  %657 = vmatpush1.msra.mxu0 %v212
  %658 = vmatprep.subr.mxu0 0.0
  %659 = vmatpush1.msra.mxu0 %v211
  %660 = vmatprep.subr.mxu0 0.0
  %661 = vmatpush1.msra.mxu0 %v210
  %662 = vmatprep.subr.mxu0 0.0
  %663 = vmatpush1.msra.mxu0 %v209
  %664 = vmatprep.subr.mxu0 0.0
  %665 = vmatpush1.msra.mxu0 %v208
  %666 = vmatprep.subr.mxu0 0.0
  %667 = vmatpush1.msra.mxu0 %v207
  %668 = vmatprep.subr.mxu0 0.0
  %669 = vmatpush1.msra.mxu0 %v206
  %670 = vmatprep.subr.mxu0 0.0
  %671 = vmatpush1.msra.mxu0 %v205
  %672 = vmatprep.subr.mxu0 0.0
  %673 = vmatpush1.msra.mxu0 %v204
  %674 = vmatprep.subr.mxu0 0.0
  %675 = vmatpush1.msra.mxu0 %v203
  %676 = vmatprep.subr.mxu0 0.0
  %677 = vmatpush1.msra.mxu0 %v202
  %678 = vmatprep.subr.mxu0 0.0
  %679 = vmatpush1.msra.mxu0 %v201
  %680 = vmatprep.subr.mxu0 0.0
  %681 = vmatpush1.msra.mxu0 %v200
  %682 = vmatprep.subr.mxu0 0.0
  %683 = vmatpush1.msra.mxu0 %v199
  %684 = vmatprep.subr.mxu0 0.0
  %685 = vmatpush1.msra.mxu0 %v198
  %686 = vmatprep.subr.mxu0 0.0
  %687 = vmatpush1.msra.mxu0 %v197
  %688 = vmatprep.subr.mxu0 0.0
  %689 = vmatpush2.msra.mxu0 %v228
  %690 = vmatprep.subr.mxu0 0.0
  %691 = vmatpush2.msra.mxu0 %v227
  %692 = vmatprep.subr.mxu0 0.0
  %693 = vmatpush2.msra.mxu0 %v226
  %694 = vmatprep.subr.mxu0 0.0
  %695 = vmatpush2.msra.mxu0 %v225
  %696 = vmatprep.subr.mxu0 0.0
  %697 = vmatpush2.msra.mxu0 %v224
  %698 = vmatprep.subr.mxu0 0.0
  %699 = vmatpush2.msra.mxu0 %v223
  %700 = vmatprep.subr.mxu0 0.0
  %701 = vmatpush2.msra.mxu0 %v222
  %702 = vmatprep.subr.mxu0 0.0
  %703 = vmatpush2.msra.mxu0 %v221
  %704 = vmatprep.subr.mxu0 0.0
  %705 = vmatpush2.msra.mxu0 %v220
  %706 = vmatprep.subr.mxu0 0.0
  %707 = vmatpush2.msra.mxu0 %v219
  %708 = vmatprep.subr.mxu0 0.0
  %709 = vmatpush2.msra.mxu0 %v218
  %710 = vmatprep.subr.mxu0 0.0
  %711 = vmatpush2.msra.mxu0 %v217
  %712 = vmatprep.subr.mxu0 0.0
  %713 = vmatpush2.msra.mxu0 %v216
  %714 = vmatprep.subr.mxu0 0.0
  %715 = vmatpush2.msra.mxu0 %v215
  %716 = vmatprep.subr.mxu0 0.0
  %717 = vmatpush2.msra.mxu0 %v214
  %718 = vmatprep.subr.mxu0 0.0
  %719 = vmatpush2.msra.mxu0 %v213
  %720 = vmatprep.mubr.f32.mxu0 %v31
  %721 = vmatmul.mubr.f32.gmra.mxu0 %v30
  %v722 = vpop.f32.mrf.mxu0
  %v723 = vadd.f32 %v653, %v722
  %v724 = vpop.f32.mrf.mxu0
  %725 = vdwg.mxu0
  %726 = vmatprep.subr.mxu0 0.0
  %727 = vmatpush1.msra.mxu0 %v244
  %728 = vmatprep.subr.mxu0 0.0
  %729 = vmatpush1.msra.mxu0 %v243
  %730 = vmatprep.subr.mxu0 0.0
  %731 = vmatpush1.msra.mxu0 %v242
  %732 = vmatprep.subr.mxu0 0.0
  %733 = vmatpush1.msra.mxu0 %v241
  %734 = vmatprep.subr.mxu0 0.0
  %735 = vmatpush1.msra.mxu0 %v240
  %736 = vmatprep.subr.mxu0 0.0
  %737 = vmatpush1.msra.mxu0 %v239
  %738 = vmatprep.subr.mxu0 0.0
  %739 = vmatpush1.msra.mxu0 %v238
  %740 = vmatprep.subr.mxu0 0.0
  %741 = vmatpush1.msra.mxu0 %v237
  %742 = vmatprep.subr.mxu0 0.0
  %743 = vmatpush1.msra.mxu0 %v236
  %744 = vmatprep.subr.mxu0 0.0
  %745 = vmatpush1.msra.mxu0 %v235
  %746 = vmatprep.subr.mxu0 0.0
  %747 = vmatpush1.msra.mxu0 %v234
  %748 = vmatprep.subr.mxu0 0.0
  %749 = vmatpush1.msra.mxu0 %v233
  %750 = vmatprep.subr.mxu0 0.0
  %751 = vmatpush1.msra.mxu0 %v232
  %752 = vmatprep.subr.mxu0 0.0
  %753 = vmatpush1.msra.mxu0 %v231
  %754 = vmatprep.subr.mxu0 0.0
  %755 = vmatpush1.msra.mxu0 %v230
  %756 = vmatprep.subr.mxu0 0.0
  %757 = vmatpush1.msra.mxu0 %v229
  %758 = vmatprep.subr.mxu0 0.0
  %759 = vmatpush2.msra.mxu0 %v260
  %760 = vmatprep.subr.mxu0 0.0
  %761 = vmatpush2.msra.mxu0 %v259
  %762 = vmatprep.subr.mxu0 0.0
  %763 = vmatpush2.msra.mxu0 %v258
  %764 = vmatprep.subr.mxu0 0.0
  %765 = vmatpush2.msra.mxu0 %v257
  %766 = vmatprep.subr.mxu0 0.0
  %767 = vmatpush2.msra.mxu0 %v256
  %768 = vmatprep.subr.mxu0 0.0
  %769 = vmatpush2.msra.mxu0 %v255
  %770 = vmatprep.subr.mxu0 0.0
  %771 = vmatpush2.msra.mxu0 %v254
  %772 = vmatprep.subr.mxu0 0.0
  %773 = vmatpush2.msra.mxu0 %v253
  %774 = vmatprep.subr.mxu0 0.0
  %775 = vmatpush2.msra.mxu0 %v252
  %776 = vmatprep.subr.mxu0 0.0
  %777 = vmatpush2.msra.mxu0 %v251
  %778 = vmatprep.subr.mxu0 0.0
  %779 = vmatpush2.msra.mxu0 %v250
  %780 = vmatprep.subr.mxu0 0.0
  %781 = vmatpush2.msra.mxu0 %v249
  %782 = vmatprep.subr.mxu0 0.0
  %783 = vmatpush2.msra.mxu0 %v248
  %784 = vmatprep.subr.mxu0 0.0
  %785 = vmatpush2.msra.mxu0 %v247
  %786 = vmatprep.subr.mxu0 0.0
  %787 = vmatpush2.msra.mxu0 %v246
  %788 = vmatprep.subr.mxu0 0.0
  %789 = vmatpush2.msra.mxu0 %v245
  %790 = vmatprep.mubr.f32.mxu0 %v33
  %791 = vmatmul.mubr.f32.gmra.mxu0 %v32
  %v792 = vpop.f32.mrf.mxu0
  %v793 = vadd.f32 %v723, %v792
  %v794 = vpop.f32.mrf.mxu0
  %795 = vdwg.mxu0
  %796 = vmatprep.subr.mxu0 0.0
  %797 = vmatpush1.msra.mxu0 %v276
  %798 = vmatprep.subr.mxu0 0.0
  %799 = vmatpush1.msra.mxu0 %v275
  %800 = vmatprep.subr.mxu0 0.0
  %801 = vmatpush1.msra.mxu0 %v274
  %802 = vmatprep.subr.mxu0 0.0
  %803 = vmatpush1.msra.mxu0 %v273
  %804 = vmatprep.subr.mxu0 0.0
  %805 = vmatpush1.msra.mxu0 %v272
  %806 = vmatprep.subr.mxu0 0.0
  %807 = vmatpush1.msra.mxu0 %v271
  %808 = vmatprep.subr.mxu0 0.0
  %809 = vmatpush1.msra.mxu0 %v270
  %810 = vmatprep.subr.mxu0 0.0
  %811 = vmatpush1.msra.mxu0 %v269
  %812 = vmatprep.subr.mxu0 0.0
  %813 = vmatpush1.msra.mxu0 %v268
  %814 = vmatprep.subr.mxu0 0.0
  %815 = vmatpush1.msra.mxu0 %v267
  %816 = vmatprep.subr.mxu0 0.0
  %817 = vmatpush1.msra.mxu0 %v266
  %818 = vmatprep.subr.mxu0 0.0
  %819 = vmatpush1.msra.mxu0 %v265
  %820 = vmatprep.subr.mxu0 0.0
  %821 = vmatpush1.msra.mxu0 %v264
  %822 = vmatprep.subr.mxu0 0.0
  %823 = vmatpush1.msra.mxu0 %v263
  %824 = vmatprep.subr.mxu0 0.0
  %825 = vmatpush1.msra.mxu0 %v262
  %826 = vmatprep.subr.mxu0 0.0
  %827 = vmatpush1.msra.mxu0 %v261
  %828 = vmatprep.subr.mxu0 0.0
  %829 = vmatpush2.msra.mxu0 %v292
  %830 = vmatprep.subr.mxu0 0.0
  %831 = vmatpush2.msra.mxu0 %v291
  %832 = vmatprep.subr.mxu0 0.0
  %833 = vmatpush2.msra.mxu0 %v290
  %834 = vmatprep.subr.mxu0 0.0
  %835 = vmatpush2.msra.mxu0 %v289
  %836 = vmatprep.subr.mxu0 0.0
  %837 = vmatpush2.msra.mxu0 %v288
  %838 = vmatprep.subr.mxu0 0.0
  %839 = vmatpush2.msra.mxu0 %v287
  %840 = vmatprep.subr.mxu0 0.0
  %841 = vmatpush2.msra.mxu0 %v286
  %842 = vmatprep.subr.mxu0 0.0
  %843 = vmatpush2.msra.mxu0 %v285
  %844 = vmatprep.subr.mxu0 0.0
  %845 = vmatpush2.msra.mxu0 %v284
  %846 = vmatprep.subr.mxu0 0.0
  %847 = vmatpush2.msra.mxu0 %v283
  %848 = vmatprep.subr.mxu0 0.0
  %849 = vmatpush2.msra.mxu0 %v282
  %850 = vmatprep.subr.mxu0 0.0
  %851 = vmatpush2.msra.mxu0 %v281
  %852 = vmatprep.subr.mxu0 0.0
  %853 = vmatpush2.msra.mxu0 %v280
  %854 = vmatprep.subr.mxu0 0.0
  %855 = vmatpush2.msra.mxu0 %v279
  %856 = vmatprep.subr.mxu0 0.0
  %857 = vmatpush2.msra.mxu0 %v278
  %858 = vmatprep.subr.mxu0 0.0
  %859 = vmatpush2.msra.mxu0 %v277
  %860 = vmatprep.mubr.f32.mxu0 %v35
  %861 = vmatmul.mubr.f32.gmra.mxu0 %v34
  %v862 = vpop.f32.mrf.mxu0
  %v863 = vadd.f32 %v793, %v862
  %v864 = vpop.f32.mrf.mxu0
  %865 = vdwg.mxu0
  %866 = vmatprep.subr.mxu0 0.0
  %867 = vmatpush1.msra.mxu0 0.0
  %868 = vmatprep.subr.mxu0 0.0
  %869 = vmatpush1.msra.mxu0 0.0
  %870 = vmatprep.subr.mxu0 0.0
  %871 = vmatpush1.msra.mxu0 0.0
  %872 = vmatprep.subr.mxu0 0.0
  %873 = vmatpush1.msra.mxu0 0.0
  %874 = vmatprep.subr.mxu0 0.0
  %875 = vmatpush1.msra.mxu0 0.0
  %876 = vmatprep.subr.mxu0 0.0
  %877 = vmatpush1.msra.mxu0 0.0
  %878 = vmatprep.subr.mxu0 0.0
  %879 = vmatpush1.msra.mxu0 0.0
  %880 = vmatprep.subr.mxu0 0.0
  %881 = vmatpush1.msra.mxu0 0.0
  %882 = vmatprep.subr.mxu0 0.0
  %883 = vmatpush1.msra.mxu0 0.0
  %884 = vmatprep.subr.mxu0 0.0
  %885 = vmatpush1.msra.mxu0 0.0
  %886 = vmatprep.subr.mxu0 0.0
  %887 = vmatpush1.msra.mxu0 0.0
  %888 = vmatprep.subr.mxu0 0.0
  %889 = vmatpush1.msra.mxu0 0.0
  %890 = vmatprep.subr.mxu0 0.0
  %891 = vmatpush1.msra.mxu0 0.0
  %892 = vmatprep.subr.mxu0 0.0
  %893 = vmatpush1.msra.mxu0 0.0
  %894 = vmatprep.subr.mxu0 0.0
  %895 = vmatpush1.msra.mxu0 %v294
  %896 = vmatprep.subr.mxu0 0.0
  %897 = vmatpush1.msra.mxu0 %v293
  %898 = vmatprep.subr.mxu0 0.0
  %899 = vmatpush2.msra.mxu0 0.0
  %900 = vmatprep.subr.mxu0 0.0
  %901 = vmatpush2.msra.mxu0 0.0
  %902 = vmatprep.subr.mxu0 0.0
  %903 = vmatpush2.msra.mxu0 0.0
  %904 = vmatprep.subr.mxu0 0.0
  %905 = vmatpush2.msra.mxu0 0.0
  %906 = vmatprep.subr.mxu0 0.0
  %907 = vmatpush2.msra.mxu0 0.0
  %908 = vmatprep.subr.mxu0 0.0
  %909 = vmatpush2.msra.mxu0 0.0
  %910 = vmatprep.subr.mxu0 0.0
  %911 = vmatpush2.msra.mxu0 0.0
  %912 = vmatprep.subr.mxu0 0.0
  %913 = vmatpush2.msra.mxu0 0.0
  %914 = vmatprep.subr.mxu0 0.0
  %915 = vmatpush2.msra.mxu0 0.0
  %916 = vmatprep.subr.mxu0 0.0
  %917 = vmatpush2.msra.mxu0 0.0
  %918 = vmatprep.subr.mxu0 0.0
  %919 = vmatpush2.msra.mxu0 0.0
  %920 = vmatprep.subr.mxu0 0.0
  %921 = vmatpush2.msra.mxu0 0.0
  %922 = vmatprep.subr.mxu0 0.0
  %923 = vmatpush2.msra.mxu0 0.0
  %924 = vmatprep.subr.mxu0 0.0
  %925 = vmatpush2.msra.mxu0 0.0
  %926 = vmatprep.subr.mxu0 0.0
  %927 = vmatpush2.msra.mxu0 0.0
  %928 = vmatprep.subr.mxu0 0.0
  %929 = vmatpush2.msra.mxu0 0.0
  %930 = vmatprep.mubr.f32.mxu0 0.0
  %931 = vmatmul.mubr.f32.gmra.mxu0 %v304
  %v932 = vpop.f32.mrf.mxu0
  %v933 = vadd.f32 %v863, %v932
  %v934 = vpop.f32.mrf.mxu0
  %935 = vdwg.mxu0
  %v936 = vmax.f32 %v933, 0.0
  %v937 = vld [vmem:[%s3] sm:$0xff]
  %v938 = vld [vmem:[%s3 + $0x8] sm:$0xff]
  %v939 = vld [vmem:[%s3 + $0x10] sm:$0xff]
  %v940 = vld [vmem:[%s3 + $0x18] sm:$0xff]
  %v941 = vld [vmem:[%s4] sm:$0x1]
  %v943 = vlaneseq
  %v944 = vshrl.u32 %v943, 7
  %v945 = vsub.s32 0, %v944
  %v946 = vrot.slane %v941, %v945
  %vm948 = vcmask 261120
  %v950 = vsel %vm948, %v936, 0
  %952 = vmatprep.subr.mxu0 0.0
  %953 = vmatpush1.msra.mxu0 0.0
  %954 = vmatprep.subr.mxu0 0.0
  %955 = vmatpush1.msra.mxu0 0.0
  %956 = vmatprep.subr.mxu0 0.0
  %957 = vmatpush1.msra.mxu0 0.0
  %958 = vmatprep.subr.mxu0 0.0
  %959 = vmatpush1.msra.mxu0 0.0
  %960 = vmatprep.subr.mxu0 0.0
  %961 = vmatpush1.msra.mxu0 0.0
  %962 = vmatprep.subr.mxu0 0.0
  %963 = vmatpush1.msra.mxu0 0.0
  %964 = vmatprep.subr.mxu0 0.0
  %965 = vmatpush1.msra.mxu0 0.0
  %966 = vmatprep.subr.mxu0 0.0
  %967 = vmatpush1.msra.mxu0 0.0
  %968 = vmatprep.subr.mxu0 0.0
  %969 = vmatpush1.msra.mxu0 0.0
  %970 = vmatprep.subr.mxu0 0.0
  %971 = vmatpush1.msra.mxu0 0.0
  %972 = vmatprep.subr.mxu0 0.0
  %973 = vmatpush1.msra.mxu0 0.0
  %974 = vmatprep.subr.mxu0 0.0
  %975 = vmatpush1.msra.mxu0 0.0
  %976 = vmatprep.subr.mxu0 0.0
  %977 = vmatpush1.msra.mxu0 %v940
  %978 = vmatprep.subr.mxu0 0.0
  %979 = vmatpush1.msra.mxu0 %v939
  %980 = vmatprep.subr.mxu0 0.0
  %981 = vmatpush1.msra.mxu0 %v938
  %982 = vmatprep.subr.mxu0 0.0
  %983 = vmatpush1.msra.mxu0 %v937
  %984 = vmatprep.subr.mxu0 0.0
  %985 = vmatpush2.msra.mxu0 0.0
  %986 = vmatprep.subr.mxu0 0.0
  %987 = vmatpush2.msra.mxu0 0.0
  %988 = vmatprep.subr.mxu0 0.0
  %989 = vmatpush2.msra.mxu0 0.0
  %990 = vmatprep.subr.mxu0 0.0
  %991 = vmatpush2.msra.mxu0 0.0
  %992 = vmatprep.subr.mxu0 0.0
  %993 = vmatpush2.msra.mxu0 0.0
  %994 = vmatprep.subr.mxu0 0.0
  %995 = vmatpush2.msra.mxu0 0.0
  %996 = vmatprep.subr.mxu0 0.0
  %997 = vmatpush2.msra.mxu0 0.0
  %998 = vmatprep.subr.mxu0 0.0
  %999 = vmatpush2.msra.mxu0 0.0
  %1000 = vmatprep.subr.mxu0 0.0
  %1001 = vmatpush2.msra.mxu0 0.0
  %1002 = vmatprep.subr.mxu0 0.0
  %1003 = vmatpush2.msra.mxu0 0.0
  %1004 = vmatprep.subr.mxu0 0.0
  %1005 = vmatpush2.msra.mxu0 0.0
  %1006 = vmatprep.subr.mxu0 0.0
  %1007 = vmatpush2.msra.mxu0 0.0
  %1008 = vmatprep.subr.mxu0 0.0
  %1009 = vmatpush2.msra.mxu0 0.0
  %1010 = vmatprep.subr.mxu0 0.0
  %1011 = vmatpush2.msra.mxu0 0.0
  %1012 = vmatprep.subr.mxu0 0.0
  %1013 = vmatpush2.msra.mxu0 0.0
  %1014 = vmatprep.subr.mxu0 0.0
  %1015 = vmatpush2.msra.mxu0 0.0
  %1016 = vmatprep.mubr.f32.mxu0 0.0
  %1017 = vmatmul.mubr.f32.gmra.mxu0 %v950
  %v1018 = vpop.f32.mrf.mxu0
  %v1019 = vadd.f32 %v946, %v1018
  %v1020 = vpop.f32.mrf.mxu0
  %1021 = vdwg.mxu0
  %vm1022 = vcmask 15360
  %1023 = vst.msk [vmem:[%s5] sm:$0xff] %vm1022, %v1019
  // Predicated region
  $region22: #{tpu_custom_call.1} parent=0 // pred_check
    _
  $region23: #{tpu_custom_call.1} parent=0 // pred_check_branch
    %1025 = sbr.rel (0) target = $region25
  $region24: #{tpu_custom_call.1} parent=0 // pred_region
    _
  $region25: #{tpu_custom_call.1} parent=0 // pred_fallthru
    _
  // Predicated region
  $region26: #{tpu_custom_call.1} parent=0 // pred_check
    _
  $region27: #{tpu_custom_call.1} parent=0 // pred_check_branch
    %1027 = sbr.rel (0) target = $region29
  $region28: #{tpu_custom_call.1} parent=0 // pred_region
    _
  $region29: #{tpu_custom_call.1} parent=0 // pred_fallthru
    _

</llo_original>
